<compile_context>
chip_gen: v7x
topology: tpu7x:2x2x1
jax: 0.10.0
libtpu: 0.0.40
codegen_flags: <defaults>
</compile_context>

<pallas_src>
import jax
import jax.numpy as jnp
from jax.experimental import pallas as pl
from jax.experimental.pallas import tpu as pltpu


def _round_up(x, m):
    return ((x + m - 1) // m) * m


def mlp_kernel(x_ref, wf_ref, bf_ref, o_ref):
    # Single fused affine layer: y = x @ Wf + bf
    # (MXU bf16 x bf16 -> f32 accumulate; bias add on the VPU in f32).
    x = x_ref[...].astype(wf_ref.dtype)            # cast in VMEM, no extra HBM pass
    y = jnp.dot(x, wf_ref[...], preferred_element_type=jnp.float32)
    y = y + bf_ref[...]                            # (1, Cp) broadcasts over rows
    o_ref[...] = y.astype(o_ref.dtype)


def fold_and_pad_params(w1, b1, w2, b2, *, compute_dtype=jnp.bfloat16):
    """One-time (outside the hot path) parameter prep.

    Folds the two activation-free Linear layers into one affine map and pads
    the output dim to a lane-friendly multiple of 128.

    w1: (C_in, H)   (PyTorch layer_1.weight transposed)
    b1: (H,) or (1, H)
    w2: (H, C_out)  (PyTorch layer_2.weight transposed)
    b2: (C_out,) or (1, C_out)
    returns (wf_p: (C_in, Cp) compute_dtype, bf_p: (1, Cp) f32, c_out)
    """
    w1 = jnp.asarray(w1, jnp.float32)
    w2 = jnp.asarray(w2, jnp.float32)
    b1 = jnp.reshape(jnp.asarray(b1, jnp.float32), (1, -1))
    b2 = jnp.reshape(jnp.asarray(b2, jnp.float32), (1, -1))

    wf = w1 @ w2            # (C_in, C_out) — exact fold, no activation between layers
    bf = b1 @ w2 + b2       # (1, C_out)

    c_in, c_out = wf.shape
    c_out_p = _round_up(c_out, 128)
    wf_p = jnp.zeros((c_in, c_out_p), compute_dtype).at[:, :c_out].set(
        wf.astype(compute_dtype))
    bf_p = jnp.zeros((1, c_out_p), jnp.float32).at[:, :c_out].set(bf)
    return wf_p, bf_p, c_out


def mlp_forward(x, wf_p, bf_p, c_out, *, tile_n=2048):
    """Hot path: y = x @ Wf + bf over a batch-tiled 1-D grid.

    x    : (N, C_in)   unpadded activations (f32 or bf16)
    wf_p : (C_in, Cp)  pre-folded, pre-padded weights (fold_and_pad_params)
    bf_p : (1, Cp)     pre-folded bias (f32)
    returns (N, c_out)
    """
    n, c_in = x.shape
    assert wf_p.shape[0] == c_in
    c_out_p = wf_p.shape[1]
    out_dtype = x.dtype

    # ---- batch tiling: no bulk row padding -------------------------------
    if n <= 16:
        # Tiny batches: a single block; pad rows only to the 8-row sublane
        # minimum (<= 7 rows, and zero when n is already aligned).
        n_rows = _round_up(n, 8)
        if n_rows != n:
            x = jnp.pad(x, ((0, n_rows - n), (0, 0)))
        tn = n_rows
    else:
        # Even number of grid steps (>= 2) so both v7x TensorCores get work;
        # 16-row alignment for clean bf16 sublane packing. The ragged tail of
        # the last block is masked on store by Pallas (rows are independent).
        n_rows = n
        num_tiles = pl.cdiv(n, tile_n)
        num_tiles += num_tiles % 2            # round up to even (and >= 2)
        tn = _round_up(pl.cdiv(n, num_tiles), 16)
    grid = (pl.cdiv(n_rows, tn),)

    itemsize = jnp.dtype(x.dtype).itemsize
    cost = pl.CostEstimate(
        flops=2 * n_rows * c_in * c_out_p,
        transcendentals=0,
        bytes_accessed=(n_rows * c_in * itemsize                    # x (streamed)
                        + wf_p.size * jnp.dtype(wf_p.dtype).itemsize  # Wf (resident, once)
                        + bf_p.size * 4                              # bf
                        + n_rows * c_out_p * itemsize),              # out
    )

    out_p = pl.pallas_call(
        mlp_kernel,
        out_shape=jax.ShapeDtypeStruct((n_rows, c_out_p), out_dtype),
        grid_spec=pltpu.PrefetchScalarGridSpec(
            num_scalar_prefetch=0,
            grid=grid,
            in_specs=[
                # Activations: streamed over the batch grid axis; last dim
                # (240) equals the full array dim, so no lane padding needed.
                pl.BlockSpec((tn, c_in), lambda i: (i, 0)),
                # Folded weight / bias: constant block index -> DMA'd once and
                # held resident in VMEM (~61 KB + 512 B).
                pl.BlockSpec((c_in, c_out_p), lambda i: (0, 0)),
                pl.BlockSpec((1, c_out_p), lambda i: (0, 0)),
            ],
            # Lane-dense (multiple-of-128) output tile -> unmasked stores.
            out_specs=pl.BlockSpec((tn, c_out_p), lambda i: (i, 0)),
        ),
        compiler_params=pltpu.CompilerParams(
            # Independent batch tiles: shard across v7x's two TensorCores
            # (no-op on single-TC v5e/v6e).
            dimension_semantics=("parallel",),
        ),
        cost_estimate=cost,
    )(x, wf_p, bf_p)

    # Lane-slice back to the real output width; rows are already exact except
    # for the tiny-batch (<16) sublane pad.
    # TODO(synk): downstream consumers could take the padded (N, 128) buffer
    # directly and fuse this slice away.
    return out_p[:n, :c_out]


def init_params(key, in_channels=240, hidden_dim=500, out_channels=10,
                dtype=jnp.float32):
    """Deterministic synthetic init matching nn.Linear parameter shapes
    (stored transposed so the math is plain x @ W)."""
    k1, k2, k3, k4 = jax.random.split(key, 4)
    w1 = jax.random.normal(k1, (in_channels, hidden_dim), dtype) * 0.02
    b1 = jax.random.normal(k2, (1, hidden_dim), dtype) * 0.02
    w2 = jax.random.normal(k3, (hidden_dim, out_channels), dtype) * 0.02
    b2 = jax.random.normal(k4, (1, out_channels), dtype) * 0.02
    return w1, b1, w2, b2


if __name__ == "__main__":
    key = jax.random.PRNGKey(0)
    kx, kp, kx2 = jax.random.split(key, 3)

    in_channels, hidden_dim, out_channels = 240, 500, 10
    w1, b1, w2, b2 = init_params(kp, in_channels, hidden_dim, out_channels)

    # One-time parameter prep (outside the hot path): fold + lane-pad + bf16.
    wf_p, bf_p, c_out = fold_and_pad_params(w1, b1, w2, b2)

    # f32 two-layer reference (matches the PyTorch module exactly).
    def ref_fn(xx):
        return (xx @ w1 + b1) @ w2 + b2

    # Small batch: single block, no padding.
    x = jax.random.normal(kx, (8, in_channels), jnp.float32)
    out = jax.block_until_ready(mlp_forward(x, wf_p, bf_p, c_out))
    assert out.shape == (8, out_channels)
    assert jnp.allclose(out, ref_fn(x), atol=1e-2, rtol=1e-2)

    # Larger batch: exercises the 2-step batch grid + ragged last block.
    x2 = jax.random.normal(kx2, (300, in_channels), jnp.float32)
    out2 = jax.block_until_ready(mlp_forward(x2, wf_p, bf_p, c_out))
    assert out2.shape == (300, out_channels)
    assert jnp.allclose(out2, ref_fn(x2), atol=1e-2, rtol=1e-2)

    print("KERNEL_OK")
</pallas_src>

<mosaic_0001>
module attributes {stable_mosaic.version = 11 : i64} {
  func.func @mlp_kernel(%arg0: i32, %arg1: memref<8x240xf32, #tpu.memory_space<vmem>>, %arg2: memref<240x128xbf16, #tpu.memory_space<vmem>>, %arg3: memref<1x128xf32, #tpu.memory_space<vmem>>, %arg4: memref<8x128xf32, #tpu.memory_space<vmem>>) attributes {dimension_semantics = [#tpu.dimension_semantics<parallel>], iteration_bounds = array<i64: 1>, scalar_prefetch = 0 : i64, scratch_operands = 0 : i64, tpu.core_type = #tpu.core_type<tc>, window_params = [{transform_indices = @transform_0, window_bounds = array<i64: 8, 240>}, {pipeline_mode = #tpu.pipeline_mode<synchronous>, transform_indices = @transform_1, window_bounds = array<i64: 240, 128>}, {pipeline_mode = #tpu.pipeline_mode<synchronous>, transform_indices = @transform_2, window_bounds = array<i64: 1, 128>}, {transform_indices = @transform_3, window_bounds = array<i64: 8, 128>}]} {
    %c0 = arith.constant 0 : index
    %c0_0 = arith.constant 0 : index
    %0 = vector.load %arg1[%c0, %c0_0] : memref<8x240xf32, #tpu.memory_space<vmem>>, vector<8x240xf32>
    %1 = arith.truncf %0 : vector<8x240xf32> to vector<8x240xbf16>
    %c0_1 = arith.constant 0 : index
    %c0_2 = arith.constant 0 : index
    %2 = vector.load %arg2[%c0_1, %c0_2] : memref<240x128xbf16, #tpu.memory_space<vmem>>, vector<240x128xbf16>
    %cst = arith.constant dense<0.000000e+00> : vector<8x128xf32>
    %3 = tpu.matmul %1, %2, %cst {dimension_numbers = #tpu.dot_dimension_numbers<[1], [0], [0], [1], [0, 0, 1, 1], [], []>} : vector<8x240xbf16>, vector<240x128xbf16>, vector<8x128xf32> -> vector<8x128xf32>
    %c0_3 = arith.constant 0 : index
    %c0_4 = arith.constant 0 : index
    %4 = vector.load %arg3[%c0_3, %c0_4] : memref<1x128xf32, #tpu.memory_space<vmem>>, vector<1x128xf32>
    %5 = vector.broadcast %4 : vector<1x128xf32> to vector<8x128xf32>
    %6 = arith.addf %3, %5 : vector<8x128xf32>
    %c0_5 = arith.constant 0 : index
    %c0_6 = arith.constant 0 : index
    %7 = vector.load %arg4[%c0_5, %c0_6] : memref<8x128xf32, #tpu.memory_space<vmem>>, vector<8x128xf32>
    tpu.vector_store %arg4[%c0_5, %c0_6], %6 {strides = array<i32>} : memref<8x128xf32, #tpu.memory_space<vmem>>, vector<8x128xf32>,
    return
  }
  func.func @transform_0(%arg0: i32) -> (i32, i32) {
    %c0_i32 = arith.constant 0 : i32
    %c0_i32_0 = arith.constant 0 : i32
    return %arg0, %c0_i32 : i32, i32
  }
  func.func @transform_1(%arg0: i32) -> (i32, i32) {
    %c0_i32 = arith.constant 0 : i32
    %c0_i32_0 = arith.constant 0 : i32
    %c0_i32_1 = arith.constant 0 : i32
    return %c0_i32, %c0_i32_0 : i32, i32
  }
  func.func @transform_2(%arg0: i32) -> (i32, i32) {
    %c0_i32 = arith.constant 0 : i32
    %c0_i32_0 = arith.constant 0 : i32
    %c0_i32_1 = arith.constant 0 : i32
    return %c0_i32, %c0_i32_0 : i32, i32
  }
  func.func @transform_3(%arg0: i32) -> (i32, i32) {
    %c0_i32 = arith.constant 0 : i32
    %c0_i32_0 = arith.constant 0 : i32
    return %arg0, %c0_i32 : i32, i32
  }
}

</mosaic_0001>

<llo_original>
// kernel: tpu_custom_call.1
$region0: #{tpu_custom_call.1}
  #allocation0 [shape = 'u32[]', space=smem, size = 0x4, offset = 0x4, fixed_abs, tag = 'smem constant byte address 0x4 - core index']
  #allocation1 [shape = 'u32[144,128]{1,0:T(1,128)}', space=vmem, size = 0x12000, scoped, tag = 'internal scratch']
  %s0 = inlined_call_operand.hbm [shape: f32[8,240], index: 0, kind: input, shape index: {}]
  %s1 = inlined_call_operand.hbm [shape: bf16[240,128], index: 1, kind: input, shape index: {}]
  %s2 = inlined_call_operand.vmem [shape: f32[1,128], index: 2, kind: input, shape index: {}]
  %s3 = inlined_call_operand.hbm [shape: f32[8,128], index: 3, kind: output, shape index: {}]
  %s4 = sld [smem:[#allocation0]]
  $region30: #{tpu_custom_call.1} parent=0
    _
  %s6 = ssub.s32 1, %s4
  %s7 = scalar_select 0, %s6, %s4
  $region1: #{tpu_custom_call.1} parent=0
    #allocation2 [shape = 'u8[8192]{0}', space=vmem, size = 0x2000, scoped, tag = 'input window, operand 0, single buffered']
    #allocation3 [shape = 's32[1]{0}', space=sflag, size = 0x4, scoped, tag = 'scoped memory for tpu_custom_call.1']
    #allocation4 [shape = 's32[1]{0}', space=sflag, size = 0x4, scoped, tag = 'scoped memory for tpu_custom_call.1']
    #allocation5 [shape = 'u8[61440]{0}', space=vmem, size = 0xf000, scoped, tag = 'input window, operand 1, single buffered']
    #allocation6 [shape = 's32[1]{0}', space=sflag, size = 0x4, scoped, tag = 'scoped memory for tpu_custom_call.1']
    #allocation7 [shape = 'u8[4096]{0}', space=vmem, size = 0x1000, scoped, tag = 'output window, operand 0, single buffered']
    %8 = vsyncpa [#allocation3], 0
    %9 = vsyncpa [#allocation6], 0
    %10 = vsyncpa [#allocation4], 0
    // Predicated region
    $region2: #{tpu_custom_call.1} parent=1 // pred_check
      _
    $region3: #{tpu_custom_call.1} parent=1 // pred_check_branch
      %12 = sbr.rel (0) target = $region5
    $region4: #{tpu_custom_call.1} parent=1 // pred_region
      %s14 = ssub.s32 256, 256
      %15 = vsyncadd [#allocation3], %s14
      %s17 = sshll.u32 [#allocation2], 4
      %s18 = int_to_ptr.vmem [resolvable:$true] %s17
      %20 = dma.hbm_to_vmem [thread:$0]  %s0, 256, %s18, [#allocation3]
    $region5: #{tpu_custom_call.1} parent=1 // pred_fallthru
      _
    // Predicated region
    $region6: #{tpu_custom_call.1} parent=1 // pred_check
      _
    $region7: #{tpu_custom_call.1} parent=1 // pred_check_branch
      %22 = sbr.rel (0) target = $region9
    $region8: #{tpu_custom_call.1} parent=1 // pred_region
      %s24 = ssub.s32 1920, 1920
      %25 = vsyncadd [#allocation6], %s24
      %s26 = sshll.u32 [#allocation5], 4
      %s27 = int_to_ptr.vmem [resolvable:$true] %s26
      %32 = dma.hbm_to_vmem [thread:$0]  %s1, 1920, %s27, [#allocation6], 64, 64, 4
    $region9: #{tpu_custom_call.1} parent=1 // pred_fallthru
      _
    // Predicated region
    $region10: #{tpu_custom_call.1} parent=1 // pred_check
      _
    $region11: #{tpu_custom_call.1} parent=1 // pred_check_branch
      %34 = sbr.rel (0) target = $region13
    $region12: #{tpu_custom_call.1} parent=1 // pred_region
      _
    $region13: #{tpu_custom_call.1} parent=1 // pred_fallthru
      _
    // Predicated region
    $region14: #{tpu_custom_call.1} parent=1 // pred_check
      _
    $region15: #{tpu_custom_call.1} parent=1 // pred_check_branch
      %36 = sbr.rel (0) target = $region17
    $region16: #{tpu_custom_call.1} parent=1 // pred_region
      %37 = dma.done [#allocation3], 256
    $region17: #{tpu_custom_call.1} parent=1 // pred_fallthru
      _
    // Predicated region
    $region18: #{tpu_custom_call.1} parent=1 // pred_check
      _
    $region19: #{tpu_custom_call.1} parent=1 // pred_check_branch
      %39 = sbr.rel (0) target = $region21
    $region20: #{tpu_custom_call.1} parent=1 // pred_region
      %40 = dma.done [#allocation6], 1920
    $region21: #{tpu_custom_call.1} parent=1 // pred_fallthru
      _
    %v42 = vld [vmem:[#allocation2] sm:$0xff]
    %v43 = vld [vmem:[#allocation2 + $0x8] sm:$0xff]
    %v44 = vpack.c.bf16 %v42, %v42
    %v45 = vpack.c.bf16 %v43, %v43
    %v46 = vld [vmem:[#allocation5] sm:$0xf]
    %v47 = vld [vmem:[#allocation5 + $0x4] sm:$0xf]
    %v48 = vld [vmem:[#allocation5 + $0x8] sm:$0xf]
    %v49 = vld [vmem:[#allocation5 + $0xc] sm:$0xf]
    %v50 = vld [vmem:[#allocation5 + $0x10] sm:$0xf]
    %v51 = vld [vmem:[#allocation5 + $0x14] sm:$0xf]
    %v52 = vld [vmem:[#allocation5 + $0x18] sm:$0xf]
    %v53 = vld [vmem:[#allocation5 + $0x1c] sm:$0xf]
    %v54 = vld [vmem:[#allocation5 + $0x20] sm:$0xf]
    %v55 = vld [vmem:[#allocation5 + $0x24] sm:$0xf]
    %v56 = vld [vmem:[#allocation5 + $0x28] sm:$0xf]
    %v57 = vld [vmem:[#allocation5 + $0x2c] sm:$0xf]
    %v58 = vld [vmem:[#allocation5 + $0x30] sm:$0xf]
    %v59 = vld [vmem:[#allocation5 + $0x34] sm:$0xf]
    %v60 = vld [vmem:[#allocation5 + $0x38] sm:$0xf]
    %v61 = vld [vmem:[#allocation5 + $0x3c] sm:$0xf]
    %v62 = vld [vmem:[#allocation5 + $0x40] sm:$0xf]
    %v63 = vld [vmem:[#allocation5 + $0x44] sm:$0xf]
    %v64 = vld [vmem:[#allocation5 + $0x48] sm:$0xf]
    %v65 = vld [vmem:[#allocation5 + $0x4c] sm:$0xf]
    %v66 = vld [vmem:[#allocation5 + $0x50] sm:$0xf]
    %v67 = vld [vmem:[#allocation5 + $0x54] sm:$0xf]
    %v68 = vld [vmem:[#allocation5 + $0x58] sm:$0xf]
    %v69 = vld [vmem:[#allocation5 + $0x5c] sm:$0xf]
    %v70 = vld [vmem:[#allocation5 + $0x60] sm:$0xf]
    %v71 = vld [vmem:[#allocation5 + $0x64] sm:$0xf]
    %v72 = vld [vmem:[#allocation5 + $0x68] sm:$0xf]
    %v73 = vld [vmem:[#allocation5 + $0x6c] sm:$0xf]
    %v74 = vld [vmem:[#allocation5 + $0x70] sm:$0xf]
    %v75 = vld [vmem:[#allocation5 + $0x74] sm:$0xf]
    %v76 = vld [vmem:[%s2] sm:$0x1]
    %v78 = vlaneseq
    %v79 = vshrl.u32 %v78, 7
    %v80 = vsub.s32 0, %v79
    %v81 = vrot.slane %v76, %v80
    %v113 = vunpack.c.l.b16 %v46
    %v114 = vunpack.c.l.b16 %v47
    %v115 = vunpack.c.l.b16 %v48
    %v116 = vunpack.c.l.b16 %v49
    %v117 = vunpack.c.l.b16 %v50
    %v118 = vunpack.c.l.b16 %v51
    %v119 = vunpack.c.l.b16 %v52
    %v120 = vunpack.c.l.b16 %v53
    %v121 = vunpack.c.l.b16 %v54
    %v122 = vunpack.c.l.b16 %v55
    %v123 = vunpack.c.l.b16 %v56
    %v124 = vunpack.c.l.b16 %v57
    %v125 = vunpack.c.l.b16 %v58
    %v126 = vunpack.c.l.b16 %v59
    %v127 = vunpack.c.l.b16 %v60
    %v128 = vunpack.c.l.b16 %v61
    %v129 = vunpack.c.l.b16 %v62
    %v130 = vunpack.c.l.b16 %v63
    %v131 = vunpack.c.l.b16 %v64
    %v132 = vunpack.c.l.b16 %v65
    %v133 = vunpack.c.l.b16 %v66
    %v134 = vunpack.c.l.b16 %v67
    %v135 = vunpack.c.l.b16 %v68
    %v136 = vunpack.c.l.b16 %v69
    %v137 = vunpack.c.l.b16 %v70
    %v138 = vunpack.c.l.b16 %v71
    %v139 = vunpack.c.l.b16 %v72
    %v140 = vunpack.c.l.b16 %v73
    %v141 = vunpack.c.l.b16 %v74
    %v142 = vunpack.c.l.b16 %v75
    %v143 = vpack.c.b16 %v114, %v113
    %v144 = vpack.c.b16 %v116, %v115
    %v145 = vpack.c.b16 %v118, %v117
    %v146 = vpack.c.b16 %v120, %v119
    %v147 = vpack.c.b16 %v122, %v121
    %v148 = vpack.c.b16 %v124, %v123
    %v149 = vpack.c.b16 %v126, %v125
    %v150 = vpack.c.b16 %v128, %v127
    %v151 = vpack.c.b16 %v130, %v129
    %v152 = vpack.c.b16 %v132, %v131
    %v153 = vpack.c.b16 %v134, %v133
    %v154 = vpack.c.b16 %v136, %v135
    %v155 = vpack.c.b16 %v138, %v137
    %v156 = vpack.c.b16 %v140, %v139
    %v157 = vpack.c.b16 %v142, %v141
    %vm173 = vcmask 916480
    %v175 = vsel %vm173, %v45, 0
    %177 = vmatprep.subr.bf16.mxu0 0
    %178 = vmatpush1.bf16.msra.mxu0 %v143
    %179 = vmatprep.subr.bf16.mxu0 0
    %180 = vmatpush1.bf16.msra.mxu0 %v144
    %181 = vmatprep.subr.bf16.mxu0 0
    %182 = vmatpush1.bf16.msra.mxu0 %v145
    %183 = vmatprep.subr.bf16.mxu0 0
    %184 = vmatpush1.bf16.msra.mxu0 %v146
    %185 = vmatprep.subr.bf16.mxu0 0
    %186 = vmatpush1.bf16.msra.mxu0 %v147
    %187 = vmatprep.subr.bf16.mxu0 0
    %188 = vmatpush1.bf16.msra.mxu0 %v148
    %189 = vmatprep.subr.bf16.mxu0 0
    %190 = vmatpush1.bf16.msra.mxu0 %v149
    %191 = vmatprep.subr.bf16.mxu0 0
    %192 = vmatpush1.bf16.msra.mxu0 %v150
    %193 = vmatprep.subr.bf16.mxu0 0
    %194 = vmatpush1.bf16.msra.mxu0 %v151
    %195 = vmatprep.subr.bf16.mxu0 0
    %196 = vmatpush1.bf16.msra.mxu0 %v152
    %197 = vmatprep.subr.bf16.mxu0 0
    %198 = vmatpush1.bf16.msra.mxu0 %v153
    %199 = vmatprep.subr.bf16.mxu0 0
    %200 = vmatpush1.bf16.msra.mxu0 %v154
    %201 = vmatprep.subr.bf16.mxu0 0
    %202 = vmatpush1.bf16.msra.mxu0 %v155
    %203 = vmatprep.subr.bf16.mxu0 0
    %204 = vmatpush1.bf16.msra.mxu0 %v156
    %205 = vmatprep.subr.bf16.mxu0 0
    %206 = vmatpush1.bf16.msra.mxu0 %v157
    %207 = vmatprep.subr.bf16.mxu0 0
    %208 = vmatpush1.bf16.msra.mxu0 0
    %209 = vmatprep.mubr.bf16.mxu0 %v175
    %210 = vmatmul.mubr.bf16.gmra.mrb[0].mxu0 %v44
    %v211 = vpop.f32.mrb[0].mxu0
    %v212 = vadd.f32 %v81, %v211
    %v213 = vpop.f32.mrb[0].mxu0
    %v214 = vpop.f32.mrb[0].mxu0
    %v215 = vpop.f32.mrb[0].mxu0
    %216 = vdwg.mxu0
    %217 = vst [vmem:[#allocation7] sm:$0xff] %v212
    // Predicated region
    $region22: #{tpu_custom_call.1} parent=1 // pred_check
      _
    $region23: #{tpu_custom_call.1} parent=1 // pred_check_branch
      %219 = sbr.rel (0) target = $region25
    $region24: #{tpu_custom_call.1} parent=1 // pred_region
      %s221 = ssub.s32 128, 128
      %222 = vsyncadd [#allocation4], %s221
      %s224 = sshll.u32 [#allocation7], 4
      %s225 = int_to_ptr.vmem [resolvable:$true] %s224
      %227 = dma.vmem_to_hbm [thread:$0]  %s225, 128, %s3, [#allocation4]
    $region25: #{tpu_custom_call.1} parent=1 // pred_fallthru
      _
    // Predicated region
    $region26: #{tpu_custom_call.1} parent=1 // pred_check
      _
    $region27: #{tpu_custom_call.1} parent=1 // pred_check_branch
      %229 = sbr.rel (0) target = $region29
    $region28: #{tpu_custom_call.1} parent=1 // pred_region
      %230 = dma.done [#allocation4], 128
    $region29: #{tpu_custom_call.1} parent=1 // pred_fallthru
      _
    %231 = vsyncpa [#allocation3], 1
    %232 = vsyncpa [#allocation6], 1
    %233 = vsyncpa [#allocation4], 1

</llo_original>
